<compile_context>
chip_gen: v6e
topology: v6e:2x2x1
jax: 0.10.0
libtpu: 0.0.40
codegen_flags: <defaults>
</compile_context>

<pallas_src>
import jax
import jax.numpy as jnp
from jax import lax
from jax.experimental import pallas as pl
from jax.experimental.pallas import tpu as pltpu

R = 28          # rows of q/k/v (PyTorch parameter shape)
D = 256         # feature dim
DROP_P = 0.125
KEEP_SCALE = 1.0 / (1.0 - DROP_P)


def attn_dropout_kernel(q_ref, k_ref, v_ref, keep_ref, o_ref):
    # scores = (q @ k^T) * 0.5 ; NT form: contract the last axis of both operands
    # so Mosaic feeds the MXU directly without materializing k.T.
    s = lax.dot_general(
        q_ref[...], k_ref[...],
        dimension_numbers=(((1,), (1,)), ((), ())),
        preferred_element_type=jnp.float32,
    ) * 0.5                                              # (R, R)

    # softmax over dim=1 (key axis), exact divide for tight parity.
    m = jnp.max(s, axis=-1, keepdims=True)
    e = jnp.exp(s - m)
    denom = jnp.sum(e, axis=-1, keepdims=True)

    # keep_ref already carries the 1/(1-p) inverse-keep scale (values are 0 or
    # 1/0.875), so dropout + softmax normalization fuse into one mul + one div.
    p = (e * keep_ref[...]) / denom

    # out = p @ v -> (R, 256): lane-dense (256-wide) stores.
    o_ref[...] = jnp.dot(p, v_ref[...], preferred_element_type=jnp.float32)


@jax.jit
def model_forward(x, q, k, v, key):
    # x is intentionally unused: the PyTorch forward discards it immediately.
    del x
    # Training-mode dropout (F.dropout default training=True): Bernoulli keep mask
    # pre-scaled by 1/(1-p).  Generated with portable JAX RNG so the kernel lowers
    # on TPU and in interpret mode alike.
    keep = jax.random.bernoulli(key, 1.0 - DROP_P, (R, R)).astype(jnp.float32)
    keep = keep * jnp.float32(KEEP_SCALE)

    cost = pl.CostEstimate(
        flops=2 * R * R * D * 2,                 # two small matmuls
        transcendentals=R * R,                   # exp
        bytes_accessed=4 * (3 * R * D + R * R + R * D),
    )

    return pl.pallas_call(
        attn_dropout_kernel,
        out_shape=jax.ShapeDtypeStruct((R, D), jnp.float32),
        in_specs=[
            pl.BlockSpec(memory_space=pltpu.MemorySpace.VMEM),   # q (28, 256)
            pl.BlockSpec(memory_space=pltpu.MemorySpace.VMEM),   # k (28, 256)
            pl.BlockSpec(memory_space=pltpu.MemorySpace.VMEM),   # v (28, 256)
            pl.BlockSpec(memory_space=pltpu.MemorySpace.VMEM),   # keep mask (28, 28)
        ],
        out_specs=pl.BlockSpec(memory_space=pltpu.MemorySpace.VMEM),
        cost_estimate=cost,
    )(q, k, v, keep)


if __name__ == "__main__":
    key = jax.random.PRNGKey(0)
    kq, kk, kv, kx, kd = jax.random.split(key, 5)
    # Deterministic "parameters" standing in for torch.randn(28, 256)
    q = jax.random.normal(kq, (R, D), dtype=jnp.float32)
    k = jax.random.normal(kk, (R, D), dtype=jnp.float32)
    v = jax.random.normal(kv, (R, D), dtype=jnp.float32)
    # Example input (ignored by the forward, mirrors the module signature)
    x = jax.random.normal(kx, (2, 4, 16, 16), dtype=jnp.float32)

    out = model_forward(x, q, k, v, kd)
    out = jax.block_until_ready(out)
    assert out.shape == (R, D) and out.dtype == jnp.float32
    assert bool(jnp.all(jnp.isfinite(out)))

    # Pure-JAX reference with the identical dropout mask (same key, same draw).
    keep_ref = jax.random.bernoulli(kd, 1.0 - DROP_P, (R, R)).astype(jnp.float32)
    s_ref = (q @ k.T) * 0.5
    p_ref = jax.nn.softmax(s_ref, axis=1) * keep_ref * KEEP_SCALE
    ref = p_ref @ v
    assert bool(jnp.allclose(out, ref, rtol=1e-3, atol=1e-3))

    print("KERNEL_OK")
</pallas_src>

<mosaic_0001>
module attributes {stable_mosaic.version = 11 : i64} {
  func.func @attn_dropout_kernel(%arg0: memref<28x256xf32, #tpu.memory_space<vmem>>, %arg1: memref<28x256xf32, #tpu.memory_space<vmem>>, %arg2: memref<28x256xf32, #tpu.memory_space<vmem>>, %arg3: memref<28x28xf32, #tpu.memory_space<vmem>>, %arg4: memref<28x256xf32, #tpu.memory_space<vmem>>) attributes {dimension_semantics = [], scalar_prefetch = 0 : i64, scratch_operands = 0 : i64, tpu.core_type = #tpu.core_type<tc>} {
    %c0 = arith.constant 0 : index
    %c0_0 = arith.constant 0 : index
    %0 = vector.load %arg0[%c0, %c0_0] : memref<28x256xf32, #tpu.memory_space<vmem>>, vector<28x256xf32>
    %c0_1 = arith.constant 0 : index
    %c0_2 = arith.constant 0 : index
    %1 = vector.load %arg1[%c0_1, %c0_2] : memref<28x256xf32, #tpu.memory_space<vmem>>, vector<28x256xf32>
    %cst = arith.constant dense<0.000000e+00> : vector<28x28xf32>
    %2 = tpu.matmul %0, %1, %cst {dimension_numbers = #tpu.dot_dimension_numbers<[1], [1], [0], [0], [0, 0, 1, 0], [], []>} : vector<28x256xf32>, vector<28x256xf32>, vector<28x28xf32> -> vector<28x28xf32>
    %cst_3 = arith.constant 5.000000e-01 : f32
    %3 = vector.broadcast %cst_3 : f32 to vector<28x28xf32>
    %4 = arith.mulf %2, %3 : vector<28x28xf32>
    %cst_4 = arith.constant dense<0xFF800000> : vector<28xf32>
    %5 = vector.multi_reduction <maximumf>, %4, %cst_4 [1] : vector<28x28xf32> to vector<28xf32>
    %6 = vector.shape_cast %5 : vector<28xf32> to vector<28x1xf32>
    %7 = vector.broadcast %6 : vector<28x1xf32> to vector<28x28xf32>
    %8 = arith.subf %4, %7 : vector<28x28xf32>
    %9 = math.exp %8 : vector<28x28xf32>
    %cst_5 = arith.constant dense<0.000000e+00> : vector<28xf32>
    %10 = vector.multi_reduction <add>, %9, %cst_5 [1] : vector<28x28xf32> to vector<28xf32>
    %11 = vector.shape_cast %10 : vector<28xf32> to vector<28x1xf32>
    %c0_6 = arith.constant 0 : index
    %c0_7 = arith.constant 0 : index
    %12 = vector.load %arg3[%c0_6, %c0_7] : memref<28x28xf32, #tpu.memory_space<vmem>>, vector<28x28xf32>
    %13 = arith.mulf %9, %12 : vector<28x28xf32>
    %14 = vector.broadcast %11 : vector<28x1xf32> to vector<28x28xf32>
    %15 = arith.divf %13, %14 : vector<28x28xf32>
    %c0_8 = arith.constant 0 : index
    %c0_9 = arith.constant 0 : index
    %16 = vector.load %arg2[%c0_8, %c0_9] : memref<28x256xf32, #tpu.memory_space<vmem>>, vector<28x256xf32>
    %cst_10 = arith.constant dense<0.000000e+00> : vector<28x256xf32>
    %17 = tpu.matmul %15, %16, %cst_10 {dimension_numbers = #tpu.dot_dimension_numbers<[1], [0], [0], [1], [0, 0, 1, 1], [], []>} : vector<28x28xf32>, vector<28x256xf32>, vector<28x256xf32> -> vector<28x256xf32>
    %c0_11 = arith.constant 0 : index
    %c0_12 = arith.constant 0 : index
    %18 = vector.load %arg4[%c0_11, %c0_12] : memref<28x256xf32, #tpu.memory_space<vmem>>, vector<28x256xf32>
    tpu.vector_store %arg4[%c0_11, %c0_12], %17 {strides = array<i32>} : memref<28x256xf32, #tpu.memory_space<vmem>>, vector<28x256xf32>,
    return
  }
}

</mosaic_0001>

<llo_original>
// kernel: model_forward.1
$region0: #{model_forward.1}
  #allocation0 [shape = 'u32[]', space=smem, size = 0x4, offset = 0x4, fixed_abs, tag = 'smem constant byte address 0x4 - core index']
  #allocation1 [shape = 'u32[144,128]{1,0:T(1,128)}', space=vmem, size = 0x12000, scoped, tag = 'internal scratch']
  %s0 = inlined_call_operand.hbm [shape: f32[28,256], index: 0, kind: input, shape index: {}]
  %s1 = inlined_call_operand.vmem [shape: f32[28,256], index: 1, kind: input, shape index: {}]
  %s2 = inlined_call_operand.hbm [shape: f32[28,256], index: 2, kind: input, shape index: {}]
  %s3 = inlined_call_operand.vmem [shape: f32[28,28], index: 3, kind: input, shape index: {}]
  %s4 = inlined_call_operand.hbm [shape: f32[28,256], index: 4, kind: output, shape index: {}]
  %s5 = sld [smem:[#allocation0]]
  $region34: #{model_forward.1} parent=0
    _
  %s7 = ssub.s32 1, %s5
  %s8 = scalar_select 0, %s7, %s5
  $region1: #{model_forward.1} parent=0
    #allocation2 [shape = 'u8[32768]{0}', space=vmem, size = 0x8000, scoped, tag = 'input window, operand 0, single buffered']
    #allocation3 [shape = 's32[1]{0}', space=sflag, size = 0x4, scoped, tag = 'scoped memory for model_forward.1']
    #allocation4 [shape = 's32[1]{0}', space=sflag, size = 0x4, scoped, tag = 'scoped memory for model_forward.1']
    #allocation5 [shape = 'u8[32768]{0}', space=vmem, size = 0x8000, scoped, tag = 'input window, operand 2, single buffered']
    #allocation6 [shape = 's32[1]{0}', space=sflag, size = 0x4, scoped, tag = 'scoped memory for model_forward.1']
    #allocation7 [shape = 'u8[32768]{0}', space=vmem, size = 0x8000, scoped, tag = 'output window, operand 0, single buffered']
    %9 = vsyncpa [#allocation3], 0
    %10 = vsyncpa [#allocation6], 0
    %11 = vsyncpa [#allocation4], 0
    // Predicated region
    $region2: #{model_forward.1} parent=1 // pred_check
      _
    $region3: #{model_forward.1} parent=1 // pred_check_branch
      %13 = sbr.rel (0) target = $region5
    $region4: #{model_forward.1} parent=1 // pred_region
      %s15 = ssub.s32 1024, 1024
      %16 = vsyncadd [#allocation3], %s15
      %s17 = sshll.u32 [#allocation2], 4
      %s18 = int_to_ptr.vmem [resolvable:$true] %s17
      %23 = dma.hbm_to_vmem [thread:$0]  %s0, 1024, %s18, [#allocation3], 256, 256, 16
    $region5: #{model_forward.1} parent=1 // pred_fallthru
      _
    // Predicated region
    $region6: #{model_forward.1} parent=1 // pred_check
      _
    $region7: #{model_forward.1} parent=1 // pred_check_branch
      %25 = sbr.rel (0) target = $region9
    $region8: #{model_forward.1} parent=1 // pred_region
      _
    $region9: #{model_forward.1} parent=1 // pred_fallthru
      _
    // Predicated region
    $region10: #{model_forward.1} parent=1 // pred_check
      _
    $region11: #{model_forward.1} parent=1 // pred_check_branch
      %27 = sbr.rel (0) target = $region13
    $region12: #{model_forward.1} parent=1 // pred_region
      %s29 = ssub.s32 1024, 1024
      %30 = vsyncadd [#allocation6], %s29
      %s31 = sshll.u32 [#allocation5], 4
      %s32 = int_to_ptr.vmem [resolvable:$true] %s31
      %37 = dma.hbm_to_vmem [thread:$0]  %s2, 1024, %s32, [#allocation6], 256, 256, 16
    $region13: #{model_forward.1} parent=1 // pred_fallthru
      _
    // Predicated region
    $region14: #{model_forward.1} parent=1 // pred_check
      _
    $region15: #{model_forward.1} parent=1 // pred_check_branch
      %39 = sbr.rel (0) target = $region17
    $region16: #{model_forward.1} parent=1 // pred_region
      _
    $region17: #{model_forward.1} parent=1 // pred_fallthru
      _
    // Predicated region
    $region18: #{model_forward.1} parent=1 // pred_check
      _
    $region19: #{model_forward.1} parent=1 // pred_check_branch
      %41 = sbr.rel (0) target = $region21
    $region20: #{model_forward.1} parent=1 // pred_region
      %42 = dma.done [#allocation3], 1024
    $region21: #{model_forward.1} parent=1 // pred_fallthru
      _
    // Predicated region
    $region22: #{model_forward.1} parent=1 // pred_check
      _
    $region23: #{model_forward.1} parent=1 // pred_check_branch
      %44 = sbr.rel (0) target = $region25
    $region24: #{model_forward.1} parent=1 // pred_region
      %45 = dma.done [#allocation6], 1024
    $region25: #{model_forward.1} parent=1 // pred_fallthru
      _
    %v46 = vld [vmem:[#allocation2] sm:$0xff]
    %v47 = vld [vmem:[#allocation2 + $0x8] sm:$0xff]
    %v48 = vld [vmem:[#allocation2 + $0x10] sm:$0xff]
    %v49 = vld [vmem:[#allocation2 + $0x18] sm:$0xff]
    %v50 = vld [vmem:[#allocation2 + $0x20] sm:$0xff]
    %v51 = vld [vmem:[#allocation2 + $0x28] sm:$0xff]
    %v52 = vld [vmem:[#allocation2 + $0x30] sm:$0xf]
    %v53 = vld [vmem:[#allocation2 + $0x38] sm:$0xf]
    %v54 = vld [vmem:[%s1] sm:$0xff]
    %v55 = vld [vmem:[%s1 + $0x8] sm:$0xff]
    %v56 = vld [vmem:[%s1 + $0x10] sm:$0xff]
    %v57 = vld [vmem:[%s1 + $0x18] sm:$0xff]
    %v58 = vld [vmem:[%s1 + $0x20] sm:$0xff]
    %v59 = vld [vmem:[%s1 + $0x28] sm:$0xff]
    %v60 = vld [vmem:[%s1 + $0x30] sm:$0xf]
    %v61 = vld [vmem:[%s1 + $0x38] sm:$0xf]
    %62 = vmatprep.subr.mxu0 0.0
    %63 = vmatpush1.xpose.msra.mxu0 0.0
    %64 = vmatprep.subr.mxu0 0.0
    %65 = vmatpush1.xpose.msra.mxu0 0.0
    %66 = vmatprep.subr.mxu0 0.0
    %67 = vmatpush1.xpose.msra.mxu0 0.0
    %68 = vmatprep.subr.mxu0 0.0
    %69 = vmatpush1.xpose.msra.mxu0 0.0
    %70 = vmatprep.subr.mxu0 0.0
    %71 = vmatpush1.xpose.msra.mxu0 0.0
    %72 = vmatprep.subr.mxu0 0.0
    %73 = vmatpush1.xpose.msra.mxu0 0.0
    %74 = vmatprep.subr.mxu0 0.0
    %75 = vmatpush1.xpose.msra.mxu0 0.0
    %76 = vmatprep.subr.mxu0 0.0
    %77 = vmatpush1.xpose.msra.mxu0 0.0
    %78 = vmatprep.subr.mxu0 0.0
    %79 = vmatpush1.xpose.msra.mxu0 0.0
    %80 = vmatprep.subr.mxu0 0.0
    %81 = vmatpush1.xpose.msra.mxu0 0.0
    %82 = vmatprep.subr.mxu0 0.0
    %83 = vmatpush1.xpose.msra.mxu0 0.0
    %84 = vmatprep.subr.mxu0 0.0
    %85 = vmatpush1.xpose.msra.mxu0 0.0
    %86 = vmatprep.subr.mxu0 %v61
    %87 = vmatpush1.xpose.msra.mxu0 %v60
    %88 = vmatprep.subr.mxu0 %v59
    %89 = vmatpush1.xpose.msra.mxu0 %v58
    %90 = vmatprep.subr.mxu0 %v57
    %91 = vmatpush1.xpose.msra.mxu0 %v56
    %92 = vmatprep.subr.mxu0 %v55
    %93 = vmatpush1.xpose.msra.mxu0 %v54
    %94 = vmatprep.subr.mxu0 0.0
    %95 = vmatpush2.xpose.msra.mxu0 0.0
    %96 = vmatprep.subr.mxu0 0.0
    %97 = vmatpush2.xpose.msra.mxu0 0.0
    %98 = vmatprep.subr.mxu0 0.0
    %99 = vmatpush2.xpose.msra.mxu0 0.0
    %100 = vmatprep.subr.mxu0 0.0
    %101 = vmatpush2.xpose.msra.mxu0 0.0
    %102 = vmatprep.subr.mxu0 0.0
    %103 = vmatpush2.xpose.msra.mxu0 0.0
    %104 = vmatprep.subr.mxu0 0.0
    %105 = vmatpush2.xpose.msra.mxu0 0.0
    %106 = vmatprep.subr.mxu0 0.0
    %107 = vmatpush2.xpose.msra.mxu0 0.0
    %108 = vmatprep.subr.mxu0 0.0
    %109 = vmatpush2.xpose.msra.mxu0 0.0
    %110 = vmatprep.subr.mxu0 0.0
    %111 = vmatpush2.xpose.msra.mxu0 0.0
    %112 = vmatprep.subr.mxu0 0.0
    %113 = vmatpush2.xpose.msra.mxu0 0.0
    %114 = vmatprep.subr.mxu0 0.0
    %115 = vmatpush2.xpose.msra.mxu0 0.0
    %116 = vmatprep.subr.mxu0 0.0
    %117 = vmatpush2.xpose.msra.mxu0 0.0
    %118 = vmatprep.subr.mxu0 0.0
    %119 = vmatpush2.xpose.msra.mxu0 0.0
    %120 = vmatprep.subr.mxu0 0.0
    %121 = vmatpush2.xpose.msra.mxu0 0.0
    %122 = vmatprep.subr.mxu0 0.0
    %123 = vmatpush2.xpose.msra.mxu0 0.0
    %124 = vmatprep.subr.mxu0 0.0
    %125 = vmatpush2.xpose.msra.mxu0 0.0
    %126 = vmatprep.mubr.f32.mxu0 %v47
    %127 = vmatmul.mubr.f32.gmra.mxu0 %v46
    %v128 = vpop.f32.mrf.mxu0
    %v129 = vadd.f32 0.0, %v128
    %v130 = vpop.f32.mrf.mxu0
    %131 = vmatprep.mubr.f32.mxu0 %v49
    %132 = vmatmul.mubr.f32.gmra.mxu0 %v48
    %v133 = vpop.f32.mrf.mxu0
    %v134 = vadd.f32 0.0, %v133
    %v135 = vpop.f32.mrf.mxu0
    %136 = vmatprep.mubr.f32.mxu0 %v51
    %137 = vmatmul.mubr.f32.gmra.mxu0 %v50
    %v138 = vpop.f32.mrf.mxu0
    %v139 = vadd.f32 0.0, %v138
    %v140 = vpop.f32.mrf.mxu0
    %141 = vmatprep.mubr.f32.mxu0 %v53
    %142 = vmatmul.mubr.f32.gmra.mxu0 %v52
    %v143 = vpop.f32.mrf.mxu0
    %v144 = vadd.f32 0.0, %v143
    %v145 = vpop.f32.mrf.mxu0
    %146 = vdwg.mxu0
    %v147 = vmul.f32 %v129, 0.5
    %v148 = vmul.f32 %v134, 0.5
    %v149 = vmul.f32 %v139, 0.5
    %v150 = vmul.f32 %v144, 0.5
    %vm151 = vcmask 228352
    %v152 = vsel %vm151, %v147, -inf
    %153 = vmax.xlane.f32.xlu0 %v152
    %v154 = vpop.xlane.xlu0 %153
    %v155 = vsel %vm151, %v148, -inf
    %156 = vmax.xlane.f32.xlu0 %v155
    %v157 = vpop.xlane.xlu0 %156
    %v158 = vsel %vm151, %v149, -inf
    %159 = vmax.xlane.f32.xlu0 %v158
    %v160 = vpop.xlane.xlu0 %159
    %vm161 = vcmask 224256
    %v162 = vsel %vm161, %v150, -inf
    %163 = vmax.xlane.f32.xlu0 %v162
    %v164 = vpop.xlane.xlu0 %163
    %v165 = vsub.f32 %v147, %v154
    %v166 = vsub.f32 %v148, %v157
    %v167 = vsub.f32 %v149, %v160
    %v168 = vsub.f32 %v150, %v164
    %v169 = vmul.f32 %v165, 1.442695
    %v170 = vpow.pop %v169
    %v171 = vmul.f32 %v166, 1.442695
    %v172 = vpow.pop %v171
    %v173 = vmul.f32 %v167, 1.442695
    %v174 = vpow.pop %v173
    %v175 = vmul.f32 %v168, 1.442695
    %v176 = vpow.pop %v175
    %v177 = vsel %vm151, %v170, 0.0
    %178 = vadd.xlane.f32.xlu0 %v177
    %v179 = vpop.xlane.xlu0 %178
    %v180 = vsel %vm151, %v172, 0.0
    %181 = vadd.xlane.f32.xlu0 %v180
    %v182 = vpop.xlane.xlu0 %181
    %v183 = vsel %vm151, %v174, 0.0
    %184 = vadd.xlane.f32.xlu0 %v183
    %v185 = vpop.xlane.xlu0 %184
    %v186 = vsel %vm161, %v176, 0.0
    %187 = vadd.xlane.f32.xlu0 %v186
    %v188 = vpop.xlane.xlu0 %187
    %v189 = vld [vmem:[%s3] sm:$0xff]
    %v190 = vld [vmem:[%s3 + $0x8] sm:$0xff]
    %v191 = vld [vmem:[%s3 + $0x10] sm:$0xff]
    %v192 = vld [vmem:[%s3 + $0x18] sm:$0xf]
    %v193 = vmul.f32 %v170, %v189
    %v194 = vmul.f32 %v172, %v190
    %v195 = vmul.f32 %v174, %v191
    %v196 = vmul.f32 %v176, %v192
    %v197 = vrcp.pop %v179
    %v198 = vmul.f32 %v193, %v197
    %v199 = vrcp.pop %v182
    %v200 = vmul.f32 %v194, %v199
    %v201 = vrcp.pop %v185
    %v202 = vmul.f32 %v195, %v201
    %v203 = vrcp.pop %v188
    %v204 = vmul.f32 %v196, %v203
    %v205 = vld [vmem:[#allocation5] sm:$0xff]
    %v206 = vld [vmem:[#allocation5 + $0x8] sm:$0xff]
    %v207 = vld [vmem:[#allocation5 + $0x10] sm:$0xff]
    %v208 = vld [vmem:[#allocation5 + $0x18] sm:$0xff]
    %v209 = vld [vmem:[#allocation5 + $0x20] sm:$0xff]
    %v210 = vld [vmem:[#allocation5 + $0x28] sm:$0xff]
    %v211 = vld [vmem:[#allocation5 + $0x30] sm:$0xf]
    %v212 = vld [vmem:[#allocation5 + $0x38] sm:$0xf]
    %v214 = vsel %vm151, %v198, 0
    %v217 = vsel %vm151, %v200, 0
    %v220 = vsel %vm151, %v202, 0
    %v223 = vsel %vm151, %v204, 0
    %vm225 = vcmask 1043456
    %v227 = vsel %vm225, %v211, 0
    %v230 = vsel %vm225, %v212, 0
    %232 = vmatprep.subr.mxu0 0.0
    %233 = vmatpush1.msra.mxu0 0.0
    %234 = vmatprep.subr.mxu0 0.0
    %235 = vmatpush1.msra.mxu0 0.0
    %236 = vmatprep.subr.mxu0 0.0
    %237 = vmatpush1.msra.mxu0 0.0
    %238 = vmatprep.subr.mxu0 0.0
    %239 = vmatpush1.msra.mxu0 0.0
    %240 = vmatprep.subr.mxu0 0.0
    %241 = vmatpush1.msra.mxu0 0.0
    %242 = vmatprep.subr.mxu0 0.0
    %243 = vmatpush1.msra.mxu0 0.0
    %244 = vmatprep.subr.mxu0 0.0
    %245 = vmatpush1.msra.mxu0 0.0
    %246 = vmatprep.subr.mxu0 0.0
    %247 = vmatpush1.msra.mxu0 0.0
    %248 = vmatprep.subr.mxu0 0.0
    %249 = vmatpush1.msra.mxu0 0.0
    %250 = vmatprep.subr.mxu0 0.0
    %251 = vmatpush1.msra.mxu0 0.0
    %252 = vmatprep.subr.mxu0 0.0
    %253 = vmatpush1.msra.mxu0 0.0
    %254 = vmatprep.subr.mxu0 0.0
    %255 = vmatpush1.msra.mxu0 0.0
    %256 = vmatprep.subr.mxu0 %v230
    %257 = vmatpush1.msra.mxu0 %v227
    %258 = vmatprep.subr.mxu0 %v210
    %259 = vmatpush1.msra.mxu0 %v209
    %260 = vmatprep.subr.mxu0 %v208
    %261 = vmatpush1.msra.mxu0 %v207
    %262 = vmatprep.subr.mxu0 %v206
    %263 = vmatpush1.msra.mxu0 %v205
    %264 = vmatprep.subr.mxu0 0.0
    %265 = vmatpush2.msra.mxu0 0.0
    %266 = vmatprep.subr.mxu0 0.0
    %267 = vmatpush2.msra.mxu0 0.0
    %268 = vmatprep.subr.mxu0 0.0
    %269 = vmatpush2.msra.mxu0 0.0
    %270 = vmatprep.subr.mxu0 0.0
    %271 = vmatpush2.msra.mxu0 0.0
    %272 = vmatprep.subr.mxu0 0.0
    %273 = vmatpush2.msra.mxu0 0.0
    %274 = vmatprep.subr.mxu0 0.0
    %275 = vmatpush2.msra.mxu0 0.0
    %276 = vmatprep.subr.mxu0 0.0
    %277 = vmatpush2.msra.mxu0 0.0
    %278 = vmatprep.subr.mxu0 0.0
    %279 = vmatpush2.msra.mxu0 0.0
    %280 = vmatprep.subr.mxu0 0.0
    %281 = vmatpush2.msra.mxu0 0.0
    %282 = vmatprep.subr.mxu0 0.0
    %283 = vmatpush2.msra.mxu0 0.0
    %284 = vmatprep.subr.mxu0 0.0
    %285 = vmatpush2.msra.mxu0 0.0
    %286 = vmatprep.subr.mxu0 0.0
    %287 = vmatpush2.msra.mxu0 0.0
    %288 = vmatprep.subr.mxu0 0.0
    %289 = vmatpush2.msra.mxu0 0.0
    %290 = vmatprep.subr.mxu0 0.0
    %291 = vmatpush2.msra.mxu0 0.0
    %292 = vmatprep.subr.mxu0 0.0
    %293 = vmatpush2.msra.mxu0 0.0
    %294 = vmatprep.subr.mxu0 0.0
    %295 = vmatpush2.msra.mxu0 0.0
    %296 = vmatprep.mubr.f32.mxu0 0.0
    %297 = vmatmul.mubr.f32.gmra.mxu0 %v214
    %v298 = vpop.f32.mrf.mxu0
    %v299 = vadd.f32 0.0, %v298
    %v300 = vpop.f32.mrf.mxu0
    %v301 = vadd.f32 0.0, %v300
    %302 = vmatprep.mubr.f32.mxu0 0.0
    %303 = vmatmul.mubr.f32.gmra.mxu0 %v217
    %v304 = vpop.f32.mrf.mxu0
    %v305 = vadd.f32 0.0, %v304
    %v306 = vpop.f32.mrf.mxu0
    %v307 = vadd.f32 0.0, %v306
    %308 = vmatprep.mubr.f32.mxu0 0.0
    %309 = vmatmul.mubr.f32.gmra.mxu0 %v220
    %v310 = vpop.f32.mrf.mxu0
    %v311 = vadd.f32 0.0, %v310
    %v312 = vpop.f32.mrf.mxu0
    %v313 = vadd.f32 0.0, %v312
    %314 = vmatprep.mubr.f32.mxu0 0.0
    %315 = vmatmul.mubr.f32.gmra.mxu0 %v223
    %v316 = vpop.f32.mrf.mxu0
    %v317 = vadd.f32 0.0, %v316
    %v318 = vpop.f32.mrf.mxu0
    %v319 = vadd.f32 0.0, %v318
    %320 = vdwg.mxu0
    %321 = vst [vmem:[#allocation7] sm:$0xff] %v299
    %322 = vst [vmem:[#allocation7 + $0x8] sm:$0xff] %v301
    %323 = vst [vmem:[#allocation7 + $0x10] sm:$0xff] %v305
    %324 = vst [vmem:[#allocation7 + $0x18] sm:$0xff] %v307
    %325 = vst [vmem:[#allocation7 + $0x20] sm:$0xff] %v311
    %326 = vst [vmem:[#allocation7 + $0x28] sm:$0xff] %v313
    %327 = vst [vmem:[#allocation7 + $0x30] sm:$0xf] %v317
    %328 = vst [vmem:[#allocation7 + $0x38] sm:$0xf] %v319
    // Predicated region
    $region26: #{model_forward.1} parent=1 // pred_check
      _
    $region27: #{model_forward.1} parent=1 // pred_check_branch
      %330 = sbr.rel (0) target = $region29
    $region28: #{model_forward.1} parent=1 // pred_region
      %s332 = ssub.s32 1024, 1024
      %333 = vsyncadd [#allocation4], %s332
      %s334 = sshll.u32 [#allocation7], 4
      %s335 = int_to_ptr.vmem [resolvable:$true] %s334
      %340 = dma.vmem_to_hbm [thread:$0]  %s335, 1024, %s4, [#allocation4], 256, 256, 16
    $region29: #{model_forward.1} parent=1 // pred_fallthru
      _
    // Predicated region
    $region30: #{model_forward.1} parent=1 // pred_check
      _
    $region31: #{model_forward.1} parent=1 // pred_check_branch
      %342 = sbr.rel (0) target = $region33
    $region32: #{model_forward.1} parent=1 // pred_region
      %343 = dma.done [#allocation4], 1024
    $region33: #{model_forward.1} parent=1 // pred_fallthru
      _
    %344 = vsyncpa [#allocation3], 1
    %345 = vsyncpa [#allocation6], 1
    %346 = vsyncpa [#allocation4], 1

</llo_original>
